<compile_context>
chip_gen: v7x
topology: tpu7x:2x2x1
jax: 0.10.0
libtpu: 0.0.40
codegen_flags: <defaults>
</compile_context>

<pallas_src>
import jax
import jax.numpy as jnp
from jax.experimental import pallas as pl
from jax.experimental.pallas import tpu as pltpu

GROUP = 16            # batch elements packed per 128-lane row
FEAT = 8              # input features
LANES = GROUP * FEAT  # 128


def mlp_kernel(x_ref, w1_ref, b1_ref, w2_ref, b2_ref, w3_ref, b3_ref, o_ref):
    # x_ref block: (TR, 128) -- 16 batch elements per row, 8 features each.
    x = x_ref[...]

    # Layer 1: (TR,128) @ (128,96)  [kron(I16, w1.T)]  + bias, ReLU.
    h1 = jnp.dot(x, w1_ref[...], preferred_element_type=jnp.float32) + b1_ref[...]
    h1 = jnp.maximum(h1, 0.0)                                        # (TR, 96)

    # Layer 2: (TR,96) @ (96,64) + bias, ReLU.
    h2 = jnp.dot(h1, w2_ref[...], preferred_element_type=jnp.float32) + b2_ref[...]
    h2 = jnp.maximum(h2, 0.0)                                        # (TR, 64)

    # Layer 3: (TR,64) @ (64,16) + bias, Sigmoid (EUP).
    h3 = jnp.dot(h2, w3_ref[...], preferred_element_type=jnp.float32) + b3_ref[...]
    o_ref[...] = jax.nn.sigmoid(h3)                                  # (TR, 16)


def _block_diag_params(params):
    """Torch-shaped (out,in) weights -> block-diagonal kron(I16, W.T) + tiled biases."""
    eye = jnp.eye(GROUP, dtype=jnp.float32)
    w1b = jnp.kron(eye, params["w1"].T)                    # (128, 96)
    w2b = jnp.kron(eye, params["w2"].T)                    # (96, 64)
    w3b = jnp.kron(eye, params["w3"].T)                    # (64, 16)
    b1b = jnp.tile(params["b1"], GROUP).reshape(1, -1)     # (1, 96)
    b2b = jnp.tile(params["b2"], GROUP).reshape(1, -1)     # (1, 64)
    b3b = jnp.tile(params["b3"], GROUP).reshape(1, -1)     # (1, 16)
    return w1b, b1b, w2b, b2b, w3b, b3b


def _choose_row_tile(n_rows, tr_max):
    """Biggest row tile <= tr_max, but >=2 grid steps whenever the batch allows
    (keeps both v7x TensorCores busy under the 'parallel' grid axis)."""
    if n_rows >= 2 * tr_max:
        return tr_max
    tr = max(8, ((-(-n_rows // 2) + 7) // 8) * 8)   # ceil(R/2), rounded up to sublane 8
    return min(tr, n_rows)                          # == n_rows -> single full-extent block


def mlp_forward(x, params, *, tr_max=8192):
    """x: (B, 8) float32.  params: torch-shaped weights/biases.  Returns (B, 1)."""
    B, F = x.shape
    assert F == FEAT

    # Ragged tail only: pad batch up to a multiple of 16 so the reshape below is a
    # zero-copy row-major bitcast.  16-aligned batches skip this entirely
    # (no extra HBM pass over x).
    rem = B % GROUP
    if rem:
        x = jnp.pad(x, ((0, GROUP - rem), (0, 0)))
    bp = x.shape[0]
    n_rows = bp // GROUP
    xr = x.reshape(n_rows, LANES)                   # (R, 128); free bitcast when rem == 0

    w1b, b1b, w2b, b2b, w3b, b3b = _block_diag_params(params)

    tr = _choose_row_tile(n_rows, tr_max)
    steps = pl.cdiv(n_rows, tr)                     # partial last block handled by Pallas

    const = lambda a: pl.BlockSpec(a.shape, lambda i: (0, 0))   # DMA'd once, VMEM-resident

    out = pl.pallas_call(
        mlp_kernel,
        out_shape=jax.ShapeDtypeStruct((n_rows, GROUP), jnp.float32),
        grid=(steps,),
        in_specs=[
            pl.BlockSpec((tr, LANES), lambda i: (i, 0)),        # x tile (auto double-buffered)
            const(w1b), const(b1b),
            const(w2b), const(b2b),
            const(w3b), const(b3b),
        ],
        out_specs=pl.BlockSpec((tr, GROUP), lambda i: (i, 0)),
        compiler_params=pltpu.CompilerParams(
            dimension_semantics=("parallel",),                  # split over 2 TCs on v7x
            vmem_limit_bytes=48 * 1024 * 1024,                  # ~20 MiB working set @ tr=8192
        ),
    )(xr, w1b, b1b, w2b, b2b, w3b, b3b)

    # (R, 16) row-major flattens straight back to batch order.
    return out.reshape(bp, 1)[:B]


def init_params(key):
    """Deterministic init mimicking torch.nn.Linear default (U[-1/sqrt(fan_in), +])."""
    shapes = {
        "w1": (6, 8), "b1": (6,),
        "w2": (4, 6), "b2": (4,),
        "w3": (1, 4), "b3": (1,),
    }
    fan_in = {"w1": 8, "b1": 8, "w2": 6, "b2": 6, "w3": 4, "b3": 4}
    params = {}
    keys = jax.random.split(key, len(shapes))
    for k, (name, shape) in zip(keys, shapes.items()):
        bound = 1.0 / jnp.sqrt(fan_in[name])
        params[name] = jax.random.uniform(
            k, shape, jnp.float32, minval=-bound, maxval=bound)
    return params


def reference_forward(x, params):
    h1 = jnp.maximum(x @ params["w1"].T + params["b1"], 0.0)
    h2 = jnp.maximum(h1 @ params["w2"].T + params["b2"], 0.0)
    return jax.nn.sigmoid(h2 @ params["w3"].T + params["b3"])


if __name__ == "__main__":
    key = jax.random.PRNGKey(0)
    kp, kx1, kx2, kx3 = jax.random.split(key, 4)
    params = init_params(kp)

    # 16-aligned batch: zero-copy reshape, 2-step pipelined grid.
    x1 = jax.random.normal(kx1, (256, 8), jnp.float32)
    o1 = jax.block_until_ready(mlp_forward(x1, params))
    r1 = reference_forward(x1, params)
    assert o1.shape == (256, 1), o1.shape
    assert jnp.allclose(o1, r1, atol=1e-5, rtol=1e-5)

    # Ragged batch (300 = 18*16 + 12): tail-only pad + partial last block.
    x2 = jax.random.normal(kx2, (300, 8), jnp.float32)
    o2 = jax.block_until_ready(mlp_forward(x2, params))
    r2 = reference_forward(x2, params)
    assert o2.shape == (300, 1), o2.shape
    assert jnp.allclose(o2, r2, atol=1e-5, rtol=1e-5)

    # Tiny batch (< one packed row).
    x3 = jax.random.normal(kx3, (8, 8), jnp.float32)
    o3 = jax.block_until_ready(mlp_forward(x3, params))
    r3 = reference_forward(x3, params)
    assert o3.shape == (8, 1), o3.shape
    assert jnp.allclose(o3, r3, atol=1e-5, rtol=1e-5)

    print("KERNEL_OK")
</pallas_src>

<mosaic_0001>
module attributes {stable_mosaic.version = 11 : i64} {
  func.func @mlp_kernel(%arg0: i32, %arg1: memref<8x128xf32, #tpu.memory_space<vmem>>, %arg2: memref<128x96xf32, #tpu.memory_space<vmem>>, %arg3: memref<1x96xf32, #tpu.memory_space<vmem>>, %arg4: memref<96x64xf32, #tpu.memory_space<vmem>>, %arg5: memref<1x64xf32, #tpu.memory_space<vmem>>, %arg6: memref<64x16xf32, #tpu.memory_space<vmem>>, %arg7: memref<1x16xf32, #tpu.memory_space<vmem>>, %arg8: memref<8x16xf32, #tpu.memory_space<vmem>>) attributes {dimension_semantics = [#tpu.dimension_semantics<parallel>], iteration_bounds = array<i64: 2>, scalar_prefetch = 0 : i64, scratch_operands = 0 : i64, tpu.core_type = #tpu.core_type<tc>, window_params = [{transform_indices = @transform_0, window_bounds = array<i64: 8, 128>}, {pipeline_mode = #tpu.pipeline_mode<synchronous>, transform_indices = @transform_1, window_bounds = array<i64: 128, 96>}, {pipeline_mode = #tpu.pipeline_mode<synchronous>, transform_indices = @transform_2, window_bounds = array<i64: 1, 96>}, {pipeline_mode = #tpu.pipeline_mode<synchronous>, transform_indices = @transform_3, window_bounds = array<i64: 96, 64>}, {pipeline_mode = #tpu.pipeline_mode<synchronous>, transform_indices = @transform_4, window_bounds = array<i64: 1, 64>}, {pipeline_mode = #tpu.pipeline_mode<synchronous>, transform_indices = @transform_5, window_bounds = array<i64: 64, 16>}, {pipeline_mode = #tpu.pipeline_mode<synchronous>, transform_indices = @transform_6, window_bounds = array<i64: 1, 16>}, {transform_indices = @transform_7, window_bounds = array<i64: 8, 16>}]} {
    %c0 = arith.constant 0 : index
    %c0_0 = arith.constant 0 : index
    %0 = vector.load %arg1[%c0, %c0_0] : memref<8x128xf32, #tpu.memory_space<vmem>>, vector<8x128xf32>
    %c0_1 = arith.constant 0 : index
    %c0_2 = arith.constant 0 : index
    %1 = vector.load %arg2[%c0_1, %c0_2] : memref<128x96xf32, #tpu.memory_space<vmem>>, vector<128x96xf32>
    %cst = arith.constant dense<0.000000e+00> : vector<8x96xf32>
    %2 = tpu.matmul %0, %1, %cst {dimension_numbers = #tpu.dot_dimension_numbers<[1], [0], [0], [1], [0, 0, 1, 1], [], []>} : vector<8x128xf32>, vector<128x96xf32>, vector<8x96xf32> -> vector<8x96xf32>
    %c0_3 = arith.constant 0 : index
    %c0_4 = arith.constant 0 : index
    %3 = vector.load %arg3[%c0_3, %c0_4] : memref<1x96xf32, #tpu.memory_space<vmem>>, vector<1x96xf32>
    %4 = vector.broadcast %3 : vector<1x96xf32> to vector<8x96xf32>
    %5 = arith.addf %2, %4 : vector<8x96xf32>
    %cst_5 = arith.constant 0.000000e+00 : f32
    %6 = vector.broadcast %cst_5 : f32 to vector<8x96xf32>
    %7 = arith.maximumf %5, %6 : vector<8x96xf32>
    %c0_6 = arith.constant 0 : index
    %c0_7 = arith.constant 0 : index
    %8 = vector.load %arg4[%c0_6, %c0_7] : memref<96x64xf32, #tpu.memory_space<vmem>>, vector<96x64xf32>
    %cst_8 = arith.constant dense<0.000000e+00> : vector<8x64xf32>
    %9 = tpu.matmul %7, %8, %cst_8 {dimension_numbers = #tpu.dot_dimension_numbers<[1], [0], [0], [1], [0, 0, 1, 1], [], []>} : vector<8x96xf32>, vector<96x64xf32>, vector<8x64xf32> -> vector<8x64xf32>
    %c0_9 = arith.constant 0 : index
    %c0_10 = arith.constant 0 : index
    %10 = vector.load %arg5[%c0_9, %c0_10] : memref<1x64xf32, #tpu.memory_space<vmem>>, vector<1x64xf32>
    %11 = vector.broadcast %10 : vector<1x64xf32> to vector<8x64xf32>
    %12 = arith.addf %9, %11 : vector<8x64xf32>
    %cst_11 = arith.constant 0.000000e+00 : f32
    %13 = vector.broadcast %cst_11 : f32 to vector<8x64xf32>
    %14 = arith.maximumf %12, %13 : vector<8x64xf32>
    %c0_12 = arith.constant 0 : index
    %c0_13 = arith.constant 0 : index
    %15 = vector.load %arg6[%c0_12, %c0_13] : memref<64x16xf32, #tpu.memory_space<vmem>>, vector<64x16xf32>
    %cst_14 = arith.constant dense<0.000000e+00> : vector<8x16xf32>
    %16 = tpu.matmul %14, %15, %cst_14 {dimension_numbers = #tpu.dot_dimension_numbers<[1], [0], [0], [1], [0, 0, 1, 1], [], []>} : vector<8x64xf32>, vector<64x16xf32>, vector<8x16xf32> -> vector<8x16xf32>
    %c0_15 = arith.constant 0 : index
    %c0_16 = arith.constant 0 : index
    %17 = vector.load %arg7[%c0_15, %c0_16] : memref<1x16xf32, #tpu.memory_space<vmem>>, vector<1x16xf32>
    %18 = vector.broadcast %17 : vector<1x16xf32> to vector<8x16xf32>
    %19 = arith.addf %16, %18 : vector<8x16xf32>
    %20 = arith.negf %19 : vector<8x16xf32>
    %21 = math.exp %20 : vector<8x16xf32>
    %cst_17 = arith.constant 1.000000e+00 : f32
    %22 = vector.broadcast %cst_17 : f32 to vector<8x16xf32>
    %23 = arith.addf %22, %21 : vector<8x16xf32>
    %24 = arith.divf %22, %23 : vector<8x16xf32>
    %c0_18 = arith.constant 0 : index
    %c0_19 = arith.constant 0 : index
    %25 = vector.load %arg8[%c0_18, %c0_19] : memref<8x16xf32, #tpu.memory_space<vmem>>, vector<8x16xf32>
    tpu.vector_store %arg8[%c0_18, %c0_19], %24 {strides = array<i32>} : memref<8x16xf32, #tpu.memory_space<vmem>>, vector<8x16xf32>,
    return
  }
  func.func @transform_0(%arg0: i32) -> (i32, i32) {
    %c0_i32 = arith.constant 0 : i32
    %c0_i32_0 = arith.constant 0 : i32
    return %arg0, %c0_i32 : i32, i32
  }
  func.func @transform_1(%arg0: i32) -> (i32, i32) {
    %c0_i32 = arith.constant 0 : i32
    %c0_i32_0 = arith.constant 0 : i32
    %c0_i32_1 = arith.constant 0 : i32
    return %c0_i32, %c0_i32_0 : i32, i32
  }
  func.func @transform_2(%arg0: i32) -> (i32, i32) {
    %c0_i32 = arith.constant 0 : i32
    %c0_i32_0 = arith.constant 0 : i32
    %c0_i32_1 = arith.constant 0 : i32
    return %c0_i32, %c0_i32_0 : i32, i32
  }
  func.func @transform_3(%arg0: i32) -> (i32, i32) {
    %c0_i32 = arith.constant 0 : i32
    %c0_i32_0 = arith.constant 0 : i32
    %c0_i32_1 = arith.constant 0 : i32
    return %c0_i32, %c0_i32_0 : i32, i32
  }
  func.func @transform_4(%arg0: i32) -> (i32, i32) {
    %c0_i32 = arith.constant 0 : i32
    %c0_i32_0 = arith.constant 0 : i32
    %c0_i32_1 = arith.constant 0 : i32
    return %c0_i32, %c0_i32_0 : i32, i32
  }
  func.func @transform_5(%arg0: i32) -> (i32, i32) {
    %c0_i32 = arith.constant 0 : i32
    %c0_i32_0 = arith.constant 0 : i32
    %c0_i32_1 = arith.constant 0 : i32
    return %c0_i32, %c0_i32_0 : i32, i32
  }
  func.func @transform_6(%arg0: i32) -> (i32, i32) {
    %c0_i32 = arith.constant 0 : i32
    %c0_i32_0 = arith.constant 0 : i32
    %c0_i32_1 = arith.constant 0 : i32
    return %c0_i32, %c0_i32_0 : i32, i32
  }
  func.func @transform_7(%arg0: i32) -> (i32, i32) {
    %c0_i32 = arith.constant 0 : i32
    %c0_i32_0 = arith.constant 0 : i32
    return %arg0, %c0_i32 : i32, i32
  }
}

</mosaic_0001>

<llo_original>
// kernel: tpu_custom_call.1
$region0: #{tpu_custom_call.1}
  #allocation0 [shape = 'u32[]', space=smem, size = 0x4, offset = 0x4, fixed_abs, tag = 'smem constant byte address 0x4 - core index']
  #allocation1 [shape = 'u32[144,128]{1,0:T(1,128)}', space=vmem, size = 0x12000, scoped, tag = 'internal scratch']
  %s0 = inlined_call_operand.vmem [shape: f32[16,128], index: 0, kind: input, shape index: {}]
  %s1 = inlined_call_operand.vmem [shape: f32[128,96], index: 1, kind: input, shape index: {}]
  %s2 = inlined_call_operand.vmem [shape: f32[1,96], index: 2, kind: input, shape index: {}]
  %s3 = inlined_call_operand.vmem [shape: f32[96,64], index: 3, kind: input, shape index: {}]
  %s4 = inlined_call_operand.vmem [shape: f32[1,64], index: 4, kind: input, shape index: {}]
  %s5 = inlined_call_operand.vmem [shape: f32[64,16], index: 5, kind: input, shape index: {}]
  %s6 = inlined_call_operand.vmem [shape: f32[1,16], index: 6, kind: input, shape index: {}]
  %s7 = inlined_call_operand.hbm [shape: f32[16,16], index: 7, kind: output, shape index: {}]
  %s8 = sld [smem:[#allocation0]]
  $region61: #{tpu_custom_call.1} parent=0
    _
  %s10 = ssub.s32 1, %s8
  %s11 = scalar_select 0, %s10, %s8
  $region1: #{tpu_custom_call.1} parent=0
    #allocation2 [shape = 'u8[8192]{0}', space=vmem, size = 0x2000, scoped, tag = 'output window, operand 0']
    #allocation3 [shape = 's32[2]{0}', space=sflag, size = 0x8, scoped, tag = 'scoped memory for tpu_custom_call.1']
    %12 = vsyncpa [#allocation3], 0
    %s13 = scalar_lea.sflag [#allocation3], 1
    %14 = vsyncpa %s13, 0
    loop: start=0, step=1, limit=4
    $region2: #{tpu_custom_call.1} parent=1 // loop_pre_header
      _
    $region3: #{tpu_custom_call.1} parent=1 // loop_header
      %s16 = sphi 0, %s20
      %p17 = scmp.ge.s32.totalorder %s16, 4
      %s26 = sphi 0, %s28
      %s29 = sphi 0, %s26
      %s30 = sphi 0, %s29
      %s46 = sphi 0, %s30
      %s50 = sphi 0, %s50
      %s52 = sphi 0, %s50
      %s53 = sphi 0, %s52
      %s67 = sphi 0, %s53
      %s71 = sphi 0, %s71
      %s73 = sphi 0, %s71
      %s74 = sphi 0, %s73
      %s88 = sphi 0, %s74
      %s92 = sphi 0, %s92
      %s94 = sphi 0, %s92
      %s95 = sphi 0, %s94
      %s109 = sphi 0, %s95
      %s113 = sphi 0, %s113
      %s115 = sphi 0, %s113
      %s116 = sphi 0, %s115
      %s130 = sphi 0, %s116
      %s134 = sphi 0, %s134
      %s136 = sphi 0, %s134
      %s137 = sphi 0, %s136
      %s151 = sphi 0, %s137
      %s155 = sphi 0, %s155
      %s157 = sphi 0, %s155
      %s158 = sphi 0, %s157
      %s172 = sphi 0, %s158
      %s178 = sphi 0, %s180
      %s181 = sphi 0, %s178
      %s182 = sphi 0, %s181
      %s198 = sphi 0, %s182
    $region4: #{tpu_custom_call.1} parent=1 // loop_header_branch
      %19 = sbr.rel (%p17) target = $region8
    $region5: #{tpu_custom_call.1} parent=1 // loop_body
      %s21 = ssub.s32 %s16, 1
      %s22 = ssub.s32 %s16, 2
      %s23 = sadd.s32 %s16, 1
      %s24 = ssub.s32 %s16, %s23
      %p25 = scmp.eq.s32.totalorder %s24, 0
      %s27 = sadd.s32 %s26, 1
      %s28 = scalar_select %p25, %s26, %s27
      %p31 = pneg %p25
      %p32 = scmp.eq.s32.totalorder %s16, 1
      %p33 = por %p31, %p32
      %p34 = scmp.ne.s32.totalorder %s26, %s29
      %p35 = scmp.eq.s32.totalorder %s16, 0
      %p36 = por %p34, %p35
      %p37 = scmp.ne.s32.totalorder %s26, %s29
      %p38 = scmp.eq.s32.totalorder %s21, 1
      %p39 = por %p37, %p38
      %p40 = scmp.ne.s32.totalorder %s29, %s30
      %p41 = scmp.eq.s32.totalorder %s21, 0
      %p42 = por %p40, %p41
      %p43 = scmp.ne.s32.totalorder %s29, %s30
      %p44 = scmp.eq.s32.totalorder %s22, 1
      %p45 = por %p43, %p44
      %p47 = scmp.ne.s32.totalorder %s30, %s46
      %p48 = scmp.eq.s32.totalorder %s22, 0
      %p49 = por %p47, %p48
      %s51 = sadd.s32 %s50, 1
      %p54 = scmp.eq.s32.totalorder %s16, 1
      %p55 = scmp.ne.s32.totalorder %s50, %s52
      %p56 = scmp.eq.s32.totalorder %s16, 0
      %p57 = por %p55, %p56
      %p58 = scmp.ne.s32.totalorder %s50, %s52
      %p59 = scmp.eq.s32.totalorder %s21, 1
      %p60 = por %p58, %p59
      %p61 = scmp.ne.s32.totalorder %s52, %s53
      %p62 = scmp.eq.s32.totalorder %s21, 0
      %p63 = por %p61, %p62
      %p64 = scmp.ne.s32.totalorder %s52, %s53
      %p65 = scmp.eq.s32.totalorder %s22, 1
      %p66 = por %p64, %p65
      %p68 = scmp.ne.s32.totalorder %s53, %s67
      %p69 = scmp.eq.s32.totalorder %s22, 0
      %p70 = por %p68, %p69
      %s72 = sadd.s32 %s71, 1
      %p75 = scmp.eq.s32.totalorder %s16, 1
      %p76 = scmp.ne.s32.totalorder %s71, %s73
      %p77 = scmp.eq.s32.totalorder %s16, 0
      %p78 = por %p76, %p77
      %p79 = scmp.ne.s32.totalorder %s71, %s73
      %p80 = scmp.eq.s32.totalorder %s21, 1
      %p81 = por %p79, %p80
      %p82 = scmp.ne.s32.totalorder %s73, %s74
      %p83 = scmp.eq.s32.totalorder %s21, 0
      %p84 = por %p82, %p83
      %p85 = scmp.ne.s32.totalorder %s73, %s74
      %p86 = scmp.eq.s32.totalorder %s22, 1
      %p87 = por %p85, %p86
      %p89 = scmp.ne.s32.totalorder %s74, %s88
      %p90 = scmp.eq.s32.totalorder %s22, 0
      %p91 = por %p89, %p90
      %s93 = sadd.s32 %s92, 1
      %p96 = scmp.eq.s32.totalorder %s16, 1
      %p97 = scmp.ne.s32.totalorder %s92, %s94
      %p98 = scmp.eq.s32.totalorder %s16, 0
      %p99 = por %p97, %p98
      %p100 = scmp.ne.s32.totalorder %s92, %s94
      %p101 = scmp.eq.s32.totalorder %s21, 1
      %p102 = por %p100, %p101
      %p103 = scmp.ne.s32.totalorder %s94, %s95
      %p104 = scmp.eq.s32.totalorder %s21, 0
      %p105 = por %p103, %p104
      %p106 = scmp.ne.s32.totalorder %s94, %s95
      %p107 = scmp.eq.s32.totalorder %s22, 1
      %p108 = por %p106, %p107
      %p110 = scmp.ne.s32.totalorder %s95, %s109
      %p111 = scmp.eq.s32.totalorder %s22, 0
      %p112 = por %p110, %p111
      %s114 = sadd.s32 %s113, 1
      %p117 = scmp.eq.s32.totalorder %s16, 1
      %p118 = scmp.ne.s32.totalorder %s113, %s115
      %p119 = scmp.eq.s32.totalorder %s16, 0
      %p120 = por %p118, %p119
      %p121 = scmp.ne.s32.totalorder %s113, %s115
      %p122 = scmp.eq.s32.totalorder %s21, 1
      %p123 = por %p121, %p122
      %p124 = scmp.ne.s32.totalorder %s115, %s116
      %p125 = scmp.eq.s32.totalorder %s21, 0
      %p126 = por %p124, %p125
      %p127 = scmp.ne.s32.totalorder %s115, %s116
      %p128 = scmp.eq.s32.totalorder %s22, 1
      %p129 = por %p127, %p128
      %p131 = scmp.ne.s32.totalorder %s116, %s130
      %p132 = scmp.eq.s32.totalorder %s22, 0
      %p133 = por %p131, %p132
      %s135 = sadd.s32 %s134, 1
      %p138 = scmp.eq.s32.totalorder %s16, 1
      %p139 = scmp.ne.s32.totalorder %s134, %s136
      %p140 = scmp.eq.s32.totalorder %s16, 0
      %p141 = por %p139, %p140
      %p142 = scmp.ne.s32.totalorder %s134, %s136
      %p143 = scmp.eq.s32.totalorder %s21, 1
      %p144 = por %p142, %p143
      %p145 = scmp.ne.s32.totalorder %s136, %s137
      %p146 = scmp.eq.s32.totalorder %s21, 0
      %p147 = por %p145, %p146
      %p148 = scmp.ne.s32.totalorder %s136, %s137
      %p149 = scmp.eq.s32.totalorder %s22, 1
      %p150 = por %p148, %p149
      %p152 = scmp.ne.s32.totalorder %s137, %s151
      %p153 = scmp.eq.s32.totalorder %s22, 0
      %p154 = por %p152, %p153
      %s156 = sadd.s32 %s155, 1
      %p159 = scmp.eq.s32.totalorder %s16, 1
      %p160 = scmp.ne.s32.totalorder %s155, %s157
      %p161 = scmp.eq.s32.totalorder %s16, 0
      %p162 = por %p160, %p161
      %p163 = scmp.ne.s32.totalorder %s155, %s157
      %p164 = scmp.eq.s32.totalorder %s21, 1
      %p165 = por %p163, %p164
      %p166 = scmp.ne.s32.totalorder %s157, %s158
      %p167 = scmp.eq.s32.totalorder %s21, 0
      %p168 = por %p166, %p167
      %p169 = scmp.ne.s32.totalorder %s157, %s158
      %p170 = scmp.eq.s32.totalorder %s22, 1
      %p171 = por %p169, %p170
      %p173 = scmp.ne.s32.totalorder %s158, %s172
      %p174 = scmp.eq.s32.totalorder %s22, 0
      %p175 = por %p173, %p174
      %s176 = ssub.s32 %s16, %s23
      %p177 = scmp.eq.s32.totalorder %s176, 0
      %s179 = sadd.s32 %s178, 1
      %s180 = scalar_select %p177, %s178, %s179
      %p183 = pneg %p177
      %p184 = scmp.eq.s32.totalorder %s16, 1
      %p185 = por %p183, %p184
      %p186 = scmp.ne.s32.totalorder %s178, %s181
      %p187 = scmp.eq.s32.totalorder %s16, 0
      %p188 = por %p186, %p187
      %p189 = scmp.ne.s32.totalorder %s178, %s181
      %p190 = scmp.eq.s32.totalorder %s21, 1
      %p191 = por %p189, %p190
      %p192 = scmp.ne.s32.totalorder %s181, %s182
      %p193 = scmp.eq.s32.totalorder %s21, 0
      %p194 = por %p192, %p193
      %p195 = scmp.ne.s32.totalorder %s181, %s182
      %p196 = scmp.eq.s32.totalorder %s22, 1
      %p197 = por %p195, %p196
      %p199 = scmp.ne.s32.totalorder %s182, %s198
      %p200 = scmp.eq.s32.totalorder %s22, 0
      %p201 = por %p199, %p200
      %p202 = scmp.le.s32.totalorder 1, %s16
      %p203 = scmp.lt.s32.totalorder %s16, 3
      %p204 = pnand %p202, %p203
      %p205 = pneg %p204
      // Predicated region
      $region9: #{tpu_custom_call.1} parent=5 // pred_check
        _
      $region10: #{tpu_custom_call.1} parent=5 // pred_check_branch
        %207 = sbr.rel (%p204) target = $region12
      $region11: #{tpu_custom_call.1} parent=5 // pred_region
        %s208 = ssub.s32 %s16, 1
        // Predicated region
        $region13: #{tpu_custom_call.1} parent=11 // pred_check
          %p209 = pneg %p63
        $region14: #{tpu_custom_call.1} parent=11 // pred_check_branch
          %211 = sbr.rel (%p209) target = $region16
        $region15: #{tpu_custom_call.1} parent=11 // pred_region
          _
        $region16: #{tpu_custom_call.1} parent=11 // pred_fallthru
          _
        // Predicated region
        $region17: #{tpu_custom_call.1} parent=11 // pred_check
          %p212 = pneg %p84
        $region18: #{tpu_custom_call.1} parent=11 // pred_check_branch
          %214 = sbr.rel (%p212) target = $region20
        $region19: #{tpu_custom_call.1} parent=11 // pred_region
          _
        $region20: #{tpu_custom_call.1} parent=11 // pred_fallthru
          _
        // Predicated region
        $region21: #{tpu_custom_call.1} parent=11 // pred_check
          %p215 = pneg %p105
        $region22: #{tpu_custom_call.1} parent=11 // pred_check_branch
          %217 = sbr.rel (%p215) target = $region24
        $region23: #{tpu_custom_call.1} parent=11 // pred_region
          _
        $region24: #{tpu_custom_call.1} parent=11 // pred_fallthru
          _
        // Predicated region
        $region25: #{tpu_custom_call.1} parent=11 // pred_check
          %p218 = pneg %p126
        $region26: #{tpu_custom_call.1} parent=11 // pred_check_branch
          %220 = sbr.rel (%p218) target = $region28
        $region27: #{tpu_custom_call.1} parent=11 // pred_region
          _
        $region28: #{tpu_custom_call.1} parent=11 // pred_fallthru
          _
        // Predicated region
        $region29: #{tpu_custom_call.1} parent=11 // pred_check
          %p221 = pneg %p147
        $region30: #{tpu_custom_call.1} parent=11 // pred_check_branch
          %223 = sbr.rel (%p221) target = $region32
        $region31: #{tpu_custom_call.1} parent=11 // pred_region
          _
        $region32: #{tpu_custom_call.1} parent=11 // pred_fallthru
          _
        // Predicated region
        $region33: #{tpu_custom_call.1} parent=11 // pred_check
          %p224 = pneg %p168
        $region34: #{tpu_custom_call.1} parent=11 // pred_check_branch
          %226 = sbr.rel (%p224) target = $region36
        $region35: #{tpu_custom_call.1} parent=11 // pred_region
          _
        $region36: #{tpu_custom_call.1} parent=11 // pred_fallthru
          _
      $region12: #{tpu_custom_call.1} parent=5 // pred_fallthru
        _
      %p227 = scmp.lt.s32.totalorder %s16, 2
      // Predicated region
      $region37: #{tpu_custom_call.1} parent=5 // pred_check
        %p228 = pneg %p227
      $region38: #{tpu_custom_call.1} parent=5 // pred_check_branch
        %230 = sbr.rel (%p228) target = $region40
      $region39: #{tpu_custom_call.1} parent=5 // pred_region
        // Predicated region
        $region41: #{tpu_custom_call.1} parent=39 // pred_check
          %p231 = pneg %p36
        $region42: #{tpu_custom_call.1} parent=39 // pred_check_branch
          %233 = sbr.rel (%p231) target = $region44
        $region43: #{tpu_custom_call.1} parent=39 // pred_region
          %p234 = scmp.lt.s32.totalorder %s16, 1
          %s235 = scalar_select %p234, %s16, 1
          %s236 = smul.addr %s235, 8
          %s237 = scalar_lea.vmem %s0, %s236
        $region44: #{tpu_custom_call.1} parent=39 // pred_fallthru
          _
      $region40: #{tpu_custom_call.1} parent=5 // pred_fallthru
        _
      %p238 = scmp.le.s32.totalorder 1, %s16
      %p239 = scmp.lt.s32.totalorder %s16, 3
      %p240 = pnand %p238, %p239
      %p241 = pneg %p240
      // Predicated region
      $region45: #{tpu_custom_call.1} parent=5 // pred_check
        _
      $region46: #{tpu_custom_call.1} parent=5 // pred_check_branch
        %243 = sbr.rel (%p240) target = $region48
      $region47: #{tpu_custom_call.1} parent=5 // pred_region
        %s244 = ssub.s32 %s16, 1
        %p245 = scmp.lt.s32.totalorder %s21, 1
        %s246 = scalar_select %p245, %s21, 1
        %s247 = smul.addr %s246, 8
        %s248 = scalar_lea.vmem %s0, %s247
        %p249 = pneg %p42
        %p250 = pneg %p39
        %p251 = pneg %p63
        %p252 = pneg %p60
        %p253 = pneg %p84
        %p254 = pneg %p81
        %p255 = pneg %p105
        %p256 = pneg %p102
        %p257 = pneg %p126
        %p258 = pneg %p123
        %p259 = pneg %p147
        %p260 = pneg %p144
        %p261 = pneg %p168
        %p262 = pneg %p165
        %p263 = pneg %p194
        %p264 = pneg %p191
        %s265 = sand.u32 %s181, 1
        %s266 = scalar_lea.sflag [#allocation3], %s265
        %s267 = sand.u32 %s181, 1
        %s268 = smul.addr %s267, 8
        %s269 = scalar_lea.vmem [#allocation2], %s268
        %p270 = scmp.lt.s32.totalorder %s21, 1
        %s271 = scalar_select %p270, %s21, 1
        %s272 = smul.addr %s271, 8
        %s273 = scalar_lea.vmem %s0, %s272
        %v274 = vld [vmem:[%s273] sm:$0xff]
        %v275 = vld [vmem:[%s1] sm:$0xff]
        %v276 = vld [vmem:[%s1 + $0x8] sm:$0xff]
        %v277 = vld [vmem:[%s1 + $0x10] sm:$0xff]
        %v278 = vld [vmem:[%s1 + $0x18] sm:$0xff]
        %v279 = vld [vmem:[%s1 + $0x20] sm:$0xff]
        %v280 = vld [vmem:[%s1 + $0x28] sm:$0xff]
        %v281 = vld [vmem:[%s1 + $0x30] sm:$0xff]
        %v282 = vld [vmem:[%s1 + $0x38] sm:$0xff]
        %v283 = vld [vmem:[%s1 + $0x40] sm:$0xff]
        %v284 = vld [vmem:[%s1 + $0x48] sm:$0xff]
        %v285 = vld [vmem:[%s1 + $0x50] sm:$0xff]
        %v286 = vld [vmem:[%s1 + $0x58] sm:$0xff]
        %v287 = vld [vmem:[%s1 + $0x60] sm:$0xff]
        %v288 = vld [vmem:[%s1 + $0x68] sm:$0xff]
        %v289 = vld [vmem:[%s1 + $0x70] sm:$0xff]
        %v290 = vld [vmem:[%s1 + $0x78] sm:$0xff]
        %v291 = vld [vmem:[%s2] sm:$0x1]
        %v293 = vlaneseq
        %v294 = vshrl.u32 %v293, 7
        %v295 = vsub.s32 0, %v294
        %v296 = vrot.slane %v291, %v295
        %298 = vmatprep.subr.mxu0 0.0
        %299 = vmatpush1.msra.mxu0 %v275
        %300 = vmatprep.subr.mxu0 0.0
        %301 = vmatpush1.msra.mxu0 %v276
        %302 = vmatprep.subr.mxu0 0.0
        %303 = vmatpush1.msra.mxu0 %v277
        %304 = vmatprep.subr.mxu0 0.0
        %305 = vmatpush1.msra.mxu0 %v278
        %306 = vmatprep.subr.mxu0 0.0
        %307 = vmatpush1.msra.mxu0 %v279
        %308 = vmatprep.subr.mxu0 0.0
        %309 = vmatpush1.msra.mxu0 %v280
        %310 = vmatprep.subr.mxu0 0.0
        %311 = vmatpush1.msra.mxu0 %v281
        %312 = vmatprep.subr.mxu0 0.0
        %313 = vmatpush1.msra.mxu0 %v282
        %314 = vmatprep.subr.mxu0 0.0
        %315 = vmatpush1.msra.mxu0 %v283
        %316 = vmatprep.subr.mxu0 0.0
        %317 = vmatpush1.msra.mxu0 %v284
        %318 = vmatprep.subr.mxu0 0.0
        %319 = vmatpush1.msra.mxu0 %v285
        %320 = vmatprep.subr.mxu0 0.0
        %321 = vmatpush1.msra.mxu0 %v286
        %322 = vmatprep.subr.mxu0 0.0
        %323 = vmatpush1.msra.mxu0 %v287
        %324 = vmatprep.subr.mxu0 0.0
        %325 = vmatpush1.msra.mxu0 %v288
        %326 = vmatprep.subr.mxu0 0.0
        %327 = vmatpush1.msra.mxu0 %v289
        %328 = vmatprep.subr.mxu0 0.0
        %329 = vmatpush1.msra.mxu0 %v290
        %330 = vmatprep.subr.mxu0 0.0
        %331 = vmatpush1.msra.mxu0 0.0
        %332 = vmatprep.subr.mxu0 0.0
        %333 = vmatpush1.msra.mxu0 0.0
        %334 = vmatprep.subr.mxu0 0.0
        %335 = vmatpush1.msra.mxu0 0.0
        %336 = vmatprep.subr.mxu0 0.0
        %337 = vmatpush1.msra.mxu0 0.0
        %338 = vmatprep.subr.mxu0 0.0
        %339 = vmatpush1.msra.mxu0 0.0
        %340 = vmatprep.subr.mxu0 0.0
        %341 = vmatpush1.msra.mxu0 0.0
        %342 = vmatprep.subr.mxu0 0.0
        %343 = vmatpush1.msra.mxu0 0.0
        %344 = vmatprep.subr.mxu0 0.0
        %345 = vmatpush1.msra.mxu0 0.0
        %346 = vmatprep.subr.mxu0 0.0
        %347 = vmatpush1.msra.mxu0 0.0
        %348 = vmatprep.subr.mxu0 0.0
        %349 = vmatpush1.msra.mxu0 0.0
        %350 = vmatprep.subr.mxu0 0.0
        %351 = vmatpush1.msra.mxu0 0.0
        %352 = vmatprep.subr.mxu0 0.0
        %353 = vmatpush1.msra.mxu0 0.0
        %354 = vmatprep.subr.mxu0 0.0
        %355 = vmatpush1.msra.mxu0 0.0
        %356 = vmatprep.subr.mxu0 0.0
        %357 = vmatpush1.msra.mxu0 0.0
        %358 = vmatprep.subr.mxu0 0.0
        %359 = vmatpush1.msra.mxu0 0.0
        %360 = vmatprep.subr.mxu0 0.0
        %361 = vmatpush1.msra.mxu0 0.0
        %362 = vmatprep.mubr.f32.mxu0 0.0
        %363 = vmatmul.mubr.f32.gmra.mrb[0].mxu0 %v274
        %v364 = vpop.f32.mrb[0].mxu0
        %v365 = vadd.f32 %v296, %v364
        %v366 = vpop.f32.mrb[0].mxu0
        %367 = vdwg.mxu0
        %v368 = vmax.f32 %v365, 0.0
        %v369 = vld [vmem:[%s3] sm:$0xff]
        %v370 = vld [vmem:[%s3 + $0x8] sm:$0xff]
        %v371 = vld [vmem:[%s3 + $0x10] sm:$0xff]
        %v372 = vld [vmem:[%s3 + $0x18] sm:$0xff]
        %v373 = vld [vmem:[%s3 + $0x20] sm:$0xff]
        %v374 = vld [vmem:[%s3 + $0x28] sm:$0xff]
        %v375 = vld [vmem:[%s3 + $0x30] sm:$0xff]
        %v376 = vld [vmem:[%s3 + $0x38] sm:$0xff]
        %v377 = vld [vmem:[%s3 + $0x40] sm:$0xff]
        %v378 = vld [vmem:[%s3 + $0x48] sm:$0xff]
        %v379 = vld [vmem:[%s3 + $0x50] sm:$0xff]
        %v380 = vld [vmem:[%s3 + $0x58] sm:$0xff]
        %v381 = vld [vmem:[%s4] sm:$0x1]
        %v383 = vlaneseq
        %v384 = vshrl.u32 %v383, 7
        %v385 = vsub.s32 0, %v384
        %v386 = vrot.slane %v381, %v385
        %vm388 = vcmask 785408
        %v390 = vsel %vm388, %v368, 0
        %392 = vmatprep.subr.mxu0 0.0
        %393 = vmatpush1.msra.mxu0 %v369
        %394 = vmatprep.subr.mxu0 0.0
        %395 = vmatpush1.msra.mxu0 %v370
        %396 = vmatprep.subr.mxu0 0.0
        %397 = vmatpush1.msra.mxu0 %v371
        %398 = vmatprep.subr.mxu0 0.0
        %399 = vmatpush1.msra.mxu0 %v372
        %400 = vmatprep.subr.mxu0 0.0
        %401 = vmatpush1.msra.mxu0 %v373
        %402 = vmatprep.subr.mxu0 0.0
        %403 = vmatpush1.msra.mxu0 %v374
        %404 = vmatprep.subr.mxu0 0.0
        %405 = vmatpush1.msra.mxu0 %v375
        %406 = vmatprep.subr.mxu0 0.0
        %407 = vmatpush1.msra.mxu0 %v376
        %408 = vmatprep.subr.mxu0 0.0
        %409 = vmatpush1.msra.mxu0 %v377
        %410 = vmatprep.subr.mxu0 0.0
        %411 = vmatpush1.msra.mxu0 %v378
        %412 = vmatprep.subr.mxu0 0.0
        %413 = vmatpush1.msra.mxu0 %v379
        %414 = vmatprep.subr.mxu0 0.0
        %415 = vmatpush1.msra.mxu0 %v380
        %416 = vmatprep.subr.mxu0 0.0
        %417 = vmatpush1.msra.mxu0 0.0
        %418 = vmatprep.subr.mxu0 0.0
        %419 = vmatpush1.msra.mxu0 0.0
        %420 = vmatprep.subr.mxu0 0.0
        %421 = vmatpush1.msra.mxu0 0.0
        %422 = vmatprep.subr.mxu0 0.0
        %423 = vmatpush1.msra.mxu0 0.0
        %424 = vmatprep.subr.mxu0 0.0
        %425 = vmatpush1.msra.mxu0 0.0
        %426 = vmatprep.subr.mxu0 0.0
        %427 = vmatpush1.msra.mxu0 0.0
        %428 = vmatprep.subr.mxu0 0.0
        %429 = vmatpush1.msra.mxu0 0.0
        %430 = vmatprep.subr.mxu0 0.0
        %431 = vmatpush1.msra.mxu0 0.0
        %432 = vmatprep.subr.mxu0 0.0
        %433 = vmatpush1.msra.mxu0 0.0
        %434 = vmatprep.subr.mxu0 0.0
        %435 = vmatpush1.msra.mxu0 0.0
        %436 = vmatprep.subr.mxu0 0.0
        %437 = vmatpush1.msra.mxu0 0.0
        %438 = vmatprep.subr.mxu0 0.0
        %439 = vmatpush1.msra.mxu0 0.0
        %440 = vmatprep.subr.mxu0 0.0
        %441 = vmatpush1.msra.mxu0 0.0
        %442 = vmatprep.subr.mxu0 0.0
        %443 = vmatpush1.msra.mxu0 0.0
        %444 = vmatprep.subr.mxu0 0.0
        %445 = vmatpush1.msra.mxu0 0.0
        %446 = vmatprep.subr.mxu0 0.0
        %447 = vmatpush1.msra.mxu0 0.0
        %448 = vmatprep.subr.mxu0 0.0
        %449 = vmatpush1.msra.mxu0 0.0
        %450 = vmatprep.subr.mxu0 0.0
        %451 = vmatpush1.msra.mxu0 0.0
        %452 = vmatprep.subr.mxu0 0.0
        %453 = vmatpush1.msra.mxu0 0.0
        %454 = vmatprep.subr.mxu0 0.0
        %455 = vmatpush1.msra.mxu0 0.0
        %456 = vmatprep.mubr.f32.mxu0 0.0
        %457 = vmatmul.mubr.f32.gmra.mrb[0].mxu0 %v390
        %v458 = vpop.f32.mrb[0].mxu0
        %v459 = vadd.f32 %v386, %v458
        %v460 = vpop.f32.mrb[0].mxu0
        %461 = vdwg.mxu0
        %v462 = vmax.f32 %v459, 0.0
        %v463 = vld [vmem:[%s5] sm:$0xff]
        %v464 = vld [vmem:[%s5 + $0x8] sm:$0xff]
        %v465 = vld [vmem:[%s5 + $0x10] sm:$0xff]
        %v466 = vld [vmem:[%s5 + $0x18] sm:$0xff]
        %v467 = vld [vmem:[%s5 + $0x20] sm:$0xff]
        %v468 = vld [vmem:[%s5 + $0x28] sm:$0xff]
        %v469 = vld [vmem:[%s5 + $0x30] sm:$0xff]
        %v470 = vld [vmem:[%s5 + $0x38] sm:$0xff]
        %v471 = vld [vmem:[%s6] sm:$0x1]
        %v473 = vlaneseq
        %v474 = vshrl.u32 %v473, 7
        %v475 = vsub.s32 0, %v474
        %v476 = vrot.slane %v471, %v475
        %vm478 = vcmask 523264
        %v480 = vsel %vm478, %v462, 0
        %482 = vmatprep.subr.mxu0 0.0
        %483 = vmatpush1.msra.mxu0 %v463
        %484 = vmatprep.subr.mxu0 0.0
        %485 = vmatpush1.msra.mxu0 %v464
        %486 = vmatprep.subr.mxu0 0.0
        %487 = vmatpush1.msra.mxu0 %v465
        %488 = vmatprep.subr.mxu0 0.0
        %489 = vmatpush1.msra.mxu0 %v466
        %490 = vmatprep.subr.mxu0 0.0
        %491 = vmatpush1.msra.mxu0 %v467
        %492 = vmatprep.subr.mxu0 0.0
        %493 = vmatpush1.msra.mxu0 %v468
        %494 = vmatprep.subr.mxu0 0.0
        %495 = vmatpush1.msra.mxu0 %v469
        %496 = vmatprep.subr.mxu0 0.0
        %497 = vmatpush1.msra.mxu0 %v470
        %498 = vmatprep.subr.mxu0 0.0
        %499 = vmatpush1.msra.mxu0 0.0
        %500 = vmatprep.subr.mxu0 0.0
        %501 = vmatpush1.msra.mxu0 0.0
        %502 = vmatprep.subr.mxu0 0.0
        %503 = vmatpush1.msra.mxu0 0.0
        %504 = vmatprep.subr.mxu0 0.0
        %505 = vmatpush1.msra.mxu0 0.0
        %506 = vmatprep.subr.mxu0 0.0
        %507 = vmatpush1.msra.mxu0 0.0
        %508 = vmatprep.subr.mxu0 0.0
        %509 = vmatpush1.msra.mxu0 0.0
        %510 = vmatprep.subr.mxu0 0.0
        %511 = vmatpush1.msra.mxu0 0.0
        %512 = vmatprep.subr.mxu0 0.0
        %513 = vmatpush1.msra.mxu0 0.0
        %514 = vmatprep.subr.mxu0 0.0
        %515 = vmatpush1.msra.mxu0 0.0
        %516 = vmatprep.subr.mxu0 0.0
        %517 = vmatpush1.msra.mxu0 0.0
        %518 = vmatprep.subr.mxu0 0.0
        %519 = vmatpush1.msra.mxu0 0.0
        %520 = vmatprep.subr.mxu0 0.0
        %521 = vmatpush1.msra.mxu0 0.0
        %522 = vmatprep.subr.mxu0 0.0
        %523 = vmatpush1.msra.mxu0 0.0
        %524 = vmatprep.subr.mxu0 0.0
        %525 = vmatpush1.msra.mxu0 0.0
        %526 = vmatprep.subr.mxu0 0.0
        %527 = vmatpush1.msra.mxu0 0.0
        %528 = vmatprep.subr.mxu0 0.0
        %529 = vmatpush1.msra.mxu0 0.0
        %530 = vmatprep.subr.mxu0 0.0
        %531 = vmatpush1.msra.mxu0 0.0
        %532 = vmatprep.subr.mxu0 0.0
        %533 = vmatpush1.msra.mxu0 0.0
        %534 = vmatprep.subr.mxu0 0.0
        %535 = vmatpush1.msra.mxu0 0.0
        %536 = vmatprep.subr.mxu0 0.0
        %537 = vmatpush1.msra.mxu0 0.0
        %538 = vmatprep.subr.mxu0 0.0
        %539 = vmatpush1.msra.mxu0 0.0
        %540 = vmatprep.subr.mxu0 0.0
        %541 = vmatpush1.msra.mxu0 0.0
        %542 = vmatprep.subr.mxu0 0.0
        %543 = vmatpush1.msra.mxu0 0.0
        %544 = vmatprep.subr.mxu0 0.0
        %545 = vmatpush1.msra.mxu0 0.0
        %546 = vmatprep.mubr.f32.mxu0 0.0
        %547 = vmatmul.mubr.f32.gmra.mrb[0].mxu0 %v480
        %v548 = vpop.f32.mrb[0].mxu0
        %v549 = vadd.f32 %v476, %v548
        %v550 = vpop.f32.mrb[0].mxu0
        %551 = vdwg.mxu0
        %v552 = vxor.u32 %v549, 2147483648
        %v553 = vmul.f32 %v552, 1.442695
        %v554 = vpow.pop %v553
        %v555 = vadd.f32 %v554, 1.0
        %v556 = vrcp.pop %v555
        %v557 = vmul.f32 1.0, %v556
        %vm558 = vcmask 130048
        %559 = vst.msk [vmem:[%s269] sm:$0xff] %vm558, %v557
        %s560 = sand.u32 %s181, 1
        %s561 = scalar_lea.sflag [#allocation3], %s560
        %s562 = sand.u32 %s181, 1
        %s563 = smul.addr %s562, 8
        %s564 = scalar_lea.vmem [#allocation2], %s563
        // Predicated region
        $region49: #{tpu_custom_call.1} parent=47 // pred_check
          %p565 = pneg %p191
        $region50: #{tpu_custom_call.1} parent=47 // pred_check_branch
          %567 = sbr.rel (%p565) target = $region52
        $region51: #{tpu_custom_call.1} parent=47 // pred_region
          %s569 = ssub.s32 128, 128
          %570 = vsyncadd %s561, %s569
          %s571 = smul.addr %s21, 128
          %s572 = scalar_lea.hbm %s7, %s571
          %s574 = sshll.u32 %s564, 4
          %s575 = int_to_ptr.vmem [resolvable:$true] %s574
          %577 = dma.vmem_to_hbm [thread:$0]  %s575, 128, %s572, %s561
        $region52: #{tpu_custom_call.1} parent=47 // pred_fallthru
          _
      $region48: #{tpu_custom_call.1} parent=5 // pred_fallthru
        _
      %p578 = scmp.le.s32.totalorder 2, %s16
      // Predicated region
      $region53: #{tpu_custom_call.1} parent=5 // pred_check
        %p579 = pneg %p578
      $region54: #{tpu_custom_call.1} parent=5 // pred_check_branch
        %581 = sbr.rel (%p579) target = $region56
      $region55: #{tpu_custom_call.1} parent=5 // pred_region
        %s582 = ssub.s32 %s16, 2
        // Predicated region
        $region57: #{tpu_custom_call.1} parent=55 // pred_check
          %p583 = pneg %p197
        $region58: #{tpu_custom_call.1} parent=55 // pred_check_branch
          %585 = sbr.rel (%p583) target = $region60
        $region59: #{tpu_custom_call.1} parent=55 // pred_region
          %s586 = sand.u32 %s182, 1
          %s587 = scalar_lea.sflag [#allocation3], %s586
          %s588 = sand.u32 %s182, 1
          %s589 = smul.addr %s588, 8
          %s590 = scalar_lea.vmem [#allocation2], %s589
          %591 = dma.done %s587, 128
        $region60: #{tpu_custom_call.1} parent=55 // pred_fallthru
          _
      $region56: #{tpu_custom_call.1} parent=5 // pred_fallthru
        _
    $region6: #{tpu_custom_call.1} parent=1 // loop_footer
      %s20 = sadd.s32 1, %s16
    $region7: #{tpu_custom_call.1} parent=1 // loop_footer_branch
      %15 = sbr.rel target = $region3
    $region8: #{tpu_custom_call.1} parent=1 // loop_exit
      _
    %592 = vsyncpa [#allocation3], 1
    %s593 = scalar_lea.sflag [#allocation3], 1
    %594 = vsyncpa %s593, 1

</llo_original>
